<compile_context>
chip_gen: v7x
topology: tpu7x:2x2x1
jax: 0.10.0
libtpu: 0.0.40
codegen_flags: <defaults>
</compile_context>

<pallas_src>
import jax
import jax.numpy as jnp
from jax.experimental import pallas as pl
from jax.experimental.pallas import tpu as pltpu

_LANES = 128      # vreg lane width (last dim must be a multiple of this)
_SUBLANES = 8     # vreg sublane height (second-to-last dim multiple)


# ----------------------------- Pallas kernel -----------------------------

def _add_kernel(x_ref, y_ref, o_ref):
    # One (bm, cols) tile per grid step; pure VPU elementwise add.
    o_ref[...] = x_ref[...] + y_ref[...]


# ----------------------------- wrapper -----------------------------

def pallas_add(x, y, *, block_rows=256, block_cols=512):
    """Elementwise x + y on TPU via a tiled, pipelined Pallas kernel."""
    # PyTorch-style broadcasting + dtype promotion (layout glue, not compute).
    out_shape = jnp.broadcast_shapes(x.shape, y.shape)
    out_dtype = jnp.result_type(x.dtype, y.dtype)
    xb = jnp.broadcast_to(x, out_shape).astype(out_dtype)
    yb = jnp.broadcast_to(y, out_shape).astype(out_dtype)

    n = 1
    for d in out_shape:
        n *= d
    if n == 0:
        return jnp.zeros(out_shape, out_dtype)

    # Lane-dense 2-D layout: cols is a multiple of 128 (wide for large inputs
    # -> unmasked full-width stores), rows padded to the row-tile size.
    cols = block_cols if n >= block_rows * block_cols else _LANES
    rows = pl.cdiv(n, cols)
    bm = min(block_rows, pl.cdiv(rows, _SUBLANES) * _SUBLANES)
    rows_p = pl.cdiv(rows, bm) * bm
    pad = rows_p * cols - n

    xf = jnp.pad(xb.reshape(-1), (0, pad)).reshape(rows_p, cols)
    yf = jnp.pad(yb.reshape(-1), (0, pad)).reshape(rows_p, cols)

    grid = (rows_p // bm,)
    tile_spec = pl.BlockSpec((bm, cols), lambda i: (i, 0))

    out = pl.pallas_call(
        _add_kernel,
        out_shape=jax.ShapeDtypeStruct((rows_p, cols), out_dtype),
        grid=grid,
        in_specs=[tile_spec, tile_spec],
        out_specs=tile_spec,
        compiler_params=pltpu.CompilerParams(
            dimension_semantics=("parallel",),       # megacore-shardable on v7x
            vmem_limit_bytes=32 * 1024 * 1024,       # explicit, portable limit
        ),
    )(xf, yf)

    return out.reshape(-1)[:n].reshape(out_shape)


# ----------------------------- main -----------------------------

if __name__ == "__main__":
    key = jax.random.PRNGKey(0)
    kx, ky = jax.random.split(key)

    # Small shapes consistent with the module (elementwise add of two tensors).
    x = jax.random.normal(kx, (2, 4, 16, 16), jnp.float32)
    y = jax.random.normal(ky, (2, 4, 16, 16), jnp.float32)

    out = pallas_add(x, y)
    out = jax.block_until_ready(out)

    ref = x + y
    assert out.shape == ref.shape, (out.shape, ref.shape)
    assert bool(jnp.all(jnp.isfinite(out)))
    assert bool(jnp.allclose(out, ref, atol=1e-6, rtol=1e-6))
    print("KERNEL_OK")
</pallas_src>

<mosaic_0001>
module attributes {stable_mosaic.version = 11 : i64} {
  func.func @_add_kernel(%arg0: i32, %arg1: memref<16x128xf32, #tpu.memory_space<vmem>>, %arg2: memref<16x128xf32, #tpu.memory_space<vmem>>, %arg3: memref<16x128xf32, #tpu.memory_space<vmem>>) attributes {dimension_semantics = [#tpu.dimension_semantics<parallel>], iteration_bounds = array<i64: 1>, scalar_prefetch = 0 : i64, scratch_operands = 0 : i64, tpu.core_type = #tpu.core_type<tc>, window_params = [{transform_indices = @transform_0, window_bounds = array<i64: 16, 128>}, {transform_indices = @transform_1, window_bounds = array<i64: 16, 128>}, {transform_indices = @transform_2, window_bounds = array<i64: 16, 128>}]} {
    %c0 = arith.constant 0 : index
    %c0_0 = arith.constant 0 : index
    %0 = vector.load %arg1[%c0, %c0_0] : memref<16x128xf32, #tpu.memory_space<vmem>>, vector<16x128xf32>
    %c0_1 = arith.constant 0 : index
    %c0_2 = arith.constant 0 : index
    %1 = vector.load %arg2[%c0_1, %c0_2] : memref<16x128xf32, #tpu.memory_space<vmem>>, vector<16x128xf32>
    %2 = arith.addf %0, %1 : vector<16x128xf32>
    %c0_3 = arith.constant 0 : index
    %c0_4 = arith.constant 0 : index
    %3 = vector.load %arg3[%c0_3, %c0_4] : memref<16x128xf32, #tpu.memory_space<vmem>>, vector<16x128xf32>
    tpu.vector_store %arg3[%c0_3, %c0_4], %2 {strides = array<i32>} : memref<16x128xf32, #tpu.memory_space<vmem>>, vector<16x128xf32>,
    return
  }
  func.func @transform_0(%arg0: i32) -> (i32, i32) {
    %c0_i32 = arith.constant 0 : i32
    %c0_i32_0 = arith.constant 0 : i32
    return %arg0, %c0_i32 : i32, i32
  }
  func.func @transform_1(%arg0: i32) -> (i32, i32) {
    %c0_i32 = arith.constant 0 : i32
    %c0_i32_0 = arith.constant 0 : i32
    return %arg0, %c0_i32 : i32, i32
  }
  func.func @transform_2(%arg0: i32) -> (i32, i32) {
    %c0_i32 = arith.constant 0 : i32
    %c0_i32_0 = arith.constant 0 : i32
    return %arg0, %c0_i32 : i32, i32
  }
}

</mosaic_0001>

<llo_original>
// kernel: tpu_custom_call.1
$region0: #{tpu_custom_call.1}
  #allocation0 [shape = 'u32[]', space=smem, size = 0x4, offset = 0x4, fixed_abs, tag = 'smem constant byte address 0x4 - core index']
  #allocation1 [shape = 'u32[144,128]{1,0:T(1,128)}', space=vmem, size = 0x12000, scoped, tag = 'internal scratch']
  %s0 = inlined_call_operand.hbm [shape: f32[16,128], index: 0, kind: input, shape index: {}]
  %s1 = inlined_call_operand.hbm [shape: f32[16,128], index: 1, kind: input, shape index: {}]
  %s2 = inlined_call_operand.hbm [shape: f32[16,128], index: 2, kind: output, shape index: {}]
  %s3 = sld [smem:[#allocation0]]
  $region26: #{tpu_custom_call.1} parent=0
    _
  %s5 = ssub.s32 1, %s3
  %s6 = scalar_select 0, %s5, %s3
  $region1: #{tpu_custom_call.1} parent=0
    #allocation2 [shape = 'u8[8192]{0}', space=vmem, size = 0x2000, scoped, tag = 'input window, operand 0, single buffered']
    #allocation3 [shape = 's32[1]{0}', space=sflag, size = 0x4, scoped, tag = 'scoped memory for tpu_custom_call.1']
    #allocation4 [shape = 's32[1]{0}', space=sflag, size = 0x4, scoped, tag = 'scoped memory for tpu_custom_call.1']
    #allocation5 [shape = 'u8[8192]{0}', space=vmem, size = 0x2000, scoped, tag = 'input window, operand 1, single buffered']
    #allocation6 [shape = 's32[1]{0}', space=sflag, size = 0x4, scoped, tag = 'scoped memory for tpu_custom_call.1']
    #allocation7 [shape = 'u8[8192]{0}', space=vmem, size = 0x2000, scoped, tag = 'output window, operand 0, single buffered']
    %7 = vsyncpa [#allocation3], 0
    %8 = vsyncpa [#allocation6], 0
    %9 = vsyncpa [#allocation4], 0
    // Predicated region
    $region2: #{tpu_custom_call.1} parent=1 // pred_check
      _
    $region3: #{tpu_custom_call.1} parent=1 // pred_check_branch
      %11 = sbr.rel (0) target = $region5
    $region4: #{tpu_custom_call.1} parent=1 // pred_region
      %s13 = ssub.s32 256, 256
      %14 = vsyncadd [#allocation3], %s13
      %s15 = sshll.u32 [#allocation2], 4
      %s16 = int_to_ptr.vmem [resolvable:$true] %s15
      %21 = dma.hbm_to_vmem [thread:$0]  %s0, 256, %s16, [#allocation3], 128, 128, 8
    $region5: #{tpu_custom_call.1} parent=1 // pred_fallthru
      _
    // Predicated region
    $region6: #{tpu_custom_call.1} parent=1 // pred_check
      _
    $region7: #{tpu_custom_call.1} parent=1 // pred_check_branch
      %23 = sbr.rel (0) target = $region9
    $region8: #{tpu_custom_call.1} parent=1 // pred_region
      %s25 = ssub.s32 256, 256
      %26 = vsyncadd [#allocation6], %s25
      %s27 = sshll.u32 [#allocation5], 4
      %s28 = int_to_ptr.vmem [resolvable:$true] %s27
      %33 = dma.hbm_to_vmem [thread:$0]  %s1, 256, %s28, [#allocation6], 128, 128, 8
    $region9: #{tpu_custom_call.1} parent=1 // pred_fallthru
      _
    // Predicated region
    $region10: #{tpu_custom_call.1} parent=1 // pred_check
      _
    $region11: #{tpu_custom_call.1} parent=1 // pred_check_branch
      %35 = sbr.rel (0) target = $region13
    $region12: #{tpu_custom_call.1} parent=1 // pred_region
      %36 = dma.done [#allocation3], 256
    $region13: #{tpu_custom_call.1} parent=1 // pred_fallthru
      _
    // Predicated region
    $region14: #{tpu_custom_call.1} parent=1 // pred_check
      _
    $region15: #{tpu_custom_call.1} parent=1 // pred_check_branch
      %38 = sbr.rel (0) target = $region17
    $region16: #{tpu_custom_call.1} parent=1 // pred_region
      %39 = dma.done [#allocation6], 256
    $region17: #{tpu_custom_call.1} parent=1 // pred_fallthru
      _
    %v40 = vld [vmem:[#allocation2] sm:$0xff]
    %v41 = vld [vmem:[#allocation2 + $0x8] sm:$0xff]
    %v42 = vld [vmem:[#allocation5] sm:$0xff]
    %v43 = vld [vmem:[#allocation5 + $0x8] sm:$0xff]
    %v44 = vadd.f32 %v40, %v42
    %v45 = vadd.f32 %v41, %v43
    %46 = vst [vmem:[#allocation7] sm:$0xff] %v44
    %47 = vst [vmem:[#allocation7 + $0x8] sm:$0xff] %v45
    // Predicated region
    $region18: #{tpu_custom_call.1} parent=1 // pred_check
      _
    $region19: #{tpu_custom_call.1} parent=1 // pred_check_branch
      %49 = sbr.rel (0) target = $region21
    $region20: #{tpu_custom_call.1} parent=1 // pred_region
      %s51 = ssub.s32 256, 256
      %52 = vsyncadd [#allocation4], %s51
      %s53 = sshll.u32 [#allocation7], 4
      %s54 = int_to_ptr.vmem [resolvable:$true] %s53
      %59 = dma.vmem_to_hbm [thread:$0]  %s54, 256, %s2, [#allocation4], 128, 128, 8
    $region21: #{tpu_custom_call.1} parent=1 // pred_fallthru
      _
    // Predicated region
    $region22: #{tpu_custom_call.1} parent=1 // pred_check
      _
    $region23: #{tpu_custom_call.1} parent=1 // pred_check_branch
      %61 = sbr.rel (0) target = $region25
    $region24: #{tpu_custom_call.1} parent=1 // pred_region
      %62 = dma.done [#allocation4], 256
    $region25: #{tpu_custom_call.1} parent=1 // pred_fallthru
      _
    %63 = vsyncpa [#allocation3], 1
    %64 = vsyncpa [#allocation6], 1
    %65 = vsyncpa [#allocation4], 1

</llo_original>
